<compile_context>
chip_gen: v7x
topology: tpu7x:2x2x1
jax: 0.10.0
libtpu: 0.0.40
codegen_flags: <defaults>
</compile_context>

<pallas_src>
import jax
import jax.numpy as jnp
from jax.experimental import pallas as pl
from jax.experimental.pallas import tpu as pltpu


def _round_up(x, m):
    return (x + m - 1) // m * m


# ----------------------------- Pallas kernels -----------------------------

def _fused_kernel_single_k(x_ref, w_ref, s_ref, t_ref, o_ref):
    # Whole reduction dim in one VMEM tile (common case for a dim-reduce layer).
    # x: (TM, Din)  w: (Din, TN)  s/t: (1, TN)  o: (TM, TN)
    acc = jnp.dot(x_ref[...], w_ref[...], preferred_element_type=jnp.float32)
    y = acc * s_ref[...] + t_ref[...]          # folded bias + BN affine (eval)
    o_ref[...] = jnp.maximum(y, 0.0).astype(o_ref.dtype)


def _fused_kernel_multi_k(x_ref, w_ref, s_ref, t_ref, o_ref, acc_ref):
    # Split-K with a resident fp32 accumulator; epilogue only on last K step.
    k = pl.program_id(2)

    @pl.when(k == 0)
    def _():
        acc_ref[...] = jnp.zeros_like(acc_ref)

    acc_ref[...] += jnp.dot(x_ref[...], w_ref[...],
                            preferred_element_type=jnp.float32)

    @pl.when(k == pl.num_programs(2) - 1)
    def _():
        y = acc_ref[...] * s_ref[...] + t_ref[...]
        o_ref[...] = jnp.maximum(y, 0.0).astype(o_ref.dtype)


# ----------------------------- wrapper -----------------------------

def fused_linear_bn_relu(x2d, w_t, scale, shift, *, tm=256, tn=512, tk=None):
    """x2d: (M, Din); w_t: (Din, Dout) pre-transposed; scale/shift: (Dout,)."""
    M, Din = x2d.shape
    Din_w, Dout = w_t.shape
    assert Din_w == Din

    # ---- row (M) tiling: TM multiple of 8 (sublane), pad M to a TM multiple.
    tm = min(tm, _round_up(M, 8))
    Mp = _round_up(M, tm)
    if Mp != M:
        x2d = jnp.pad(x2d, ((0, Mp - M), (0, 0)))

    # ---- column (Dout) tiling: lane-dense (128-multiple) tiles when possible.
    if Dout % 128 == 0:
        tn = min(tn, Dout)
        while Dout % tn:
            tn //= 2
    else:
        tn = Dout  # small / irregular feature dim: one block covers it

    # ---- reduction (Din) tiling: split-K only when the dim is big & regular.
    if tk is None:
        tk = 2048 if (Din % 128 == 0 and Din > 2048) else Din
    if Din % tk != 0:
        tk = Din
    nk = Din // tk

    s2 = scale.reshape(1, Dout).astype(jnp.float32)
    t2 = shift.reshape(1, Dout).astype(jnp.float32)

    flops = 2 * Mp * Din * Dout
    bytes_accessed = (Mp * Din + Din * Dout + Mp * Dout + 2 * Dout) * 4
    cost = pl.CostEstimate(flops=flops, transcendentals=0,
                           bytes_accessed=bytes_accessed)

    if nk == 1:
        out = pl.pallas_call(
            _fused_kernel_single_k,
            grid=(Mp // tm, Dout // tn),
            out_shape=jax.ShapeDtypeStruct((Mp, Dout), x2d.dtype),
            in_specs=[
                pl.BlockSpec((tm, Din), lambda i, j: (i, 0)),
                # constant along i -> weight tile stays resident across row tiles
                pl.BlockSpec((Din, tn), lambda i, j: (0, j)),
                pl.BlockSpec((1, tn), lambda i, j: (0, j)),
                pl.BlockSpec((1, tn), lambda i, j: (0, j)),
            ],
            out_specs=pl.BlockSpec((tm, tn), lambda i, j: (i, j)),
            compiler_params=pltpu.CompilerParams(
                dimension_semantics=("parallel", "parallel"),
                vmem_limit_bytes=64 * 1024 * 1024,
            ),
            cost_estimate=cost,
        )(x2d, w_t, s2, t2)
    else:
        out = pl.pallas_call(
            _fused_kernel_multi_k,
            grid=(Mp // tm, Dout // tn, nk),   # reduction axis last
            out_shape=jax.ShapeDtypeStruct((Mp, Dout), x2d.dtype),
            in_specs=[
                pl.BlockSpec((tm, tk), lambda i, j, k: (i, k)),
                pl.BlockSpec((tk, tn), lambda i, j, k: (k, j)),
                pl.BlockSpec((1, tn), lambda i, j, k: (0, j)),
                pl.BlockSpec((1, tn), lambda i, j, k: (0, j)),
            ],
            out_specs=pl.BlockSpec((tm, tn), lambda i, j, k: (i, j)),
            scratch_shapes=[pltpu.VMEM((tm, tn), jnp.float32)],
            compiler_params=pltpu.CompilerParams(
                dimension_semantics=("parallel", "parallel", "arbitrary"),
                vmem_limit_bytes=64 * 1024 * 1024,
            ),
            cost_estimate=cost,
        )(x2d, w_t, s2, t2)

    return out[:M] if Mp != M else out


# ----------------------------- module glue -----------------------------

def after_pooling_dim_reduce_forward(x, params, eps=1e-5):
    """Forward of AfterPoolingDimReduceLayer (eval mode).

    x: (N, K, Din) or (M, Din).
    params: {"w_t": (Din, Dout), "b": (Dout,), "bn_gamma", "bn_beta",
             "bn_mean", "bn_var"}  (weights pre-transposed at load time).
    """
    w_t = params["w_t"]
    b = params["b"]
    gamma, beta = params["bn_gamma"], params["bn_beta"]
    mean, var = params["bn_mean"], params["bn_var"]

    # Fold BN (eval, running stats) + linear bias into per-channel scale/shift.
    s = gamma * jax.lax.rsqrt(var + eps)
    t = (b - mean) * s + beta

    if x.ndim == 3:
        N, K, Din = x.shape
        y = fused_linear_bn_relu(x.reshape(N * K, Din), w_t, s, t)
        return y.reshape(N, K, -1)
    return fused_linear_bn_relu(x, w_t, s, t)


def reference_forward(x, params, eps=1e-5):
    """Plain-JAX reference: Linear -> BatchNorm1d(eval) -> ReLU."""
    w_t, b = params["w_t"], params["b"]
    gamma, beta = params["bn_gamma"], params["bn_beta"]
    mean, var = params["bn_mean"], params["bn_var"]
    lead = x.shape[:-1]
    x2 = x.reshape(-1, x.shape[-1])
    z = x2 @ w_t + b
    z = (z - mean) * (gamma * jax.lax.rsqrt(var + eps)) + beta
    z = jnp.maximum(z, 0.0)
    return z.reshape(lead + (w_t.shape[1],))


def init_params(key, input_dim, output_dim):
    # Matches _init_params(): Linear weight ~ N(0, 0.01), bias = 0;
    # BatchNorm1d weight = 1, bias = 0, running_mean = 0, running_var = 1.
    w = 0.01 * jax.random.normal(key, (output_dim, input_dim), jnp.float32)
    return {
        "w_t": w.T,  # pre-transposed once, (Din, Dout)
        "b": jnp.zeros((output_dim,), jnp.float32),
        "bn_gamma": jnp.ones((output_dim,), jnp.float32),
        "bn_beta": jnp.zeros((output_dim,), jnp.float32),
        "bn_mean": jnp.zeros((output_dim,), jnp.float32),
        "bn_var": jnp.ones((output_dim,), jnp.float32),
    }


if __name__ == "__main__":
    key = jax.random.PRNGKey(0)
    kx, kx2, kx3, kp, kp2 = jax.random.split(key, 5)

    # --- small shapes matching the module (3-D and 2-D paths, single-K) ---
    input_dim, output_dim = 32, 16
    N, K = 2, 8
    params = init_params(kp, input_dim, output_dim)

    x3 = jax.random.normal(kx, (N, K, input_dim), jnp.float32)
    y3 = jax.block_until_ready(after_pooling_dim_reduce_forward(x3, params))
    assert y3.shape == (N, K, output_dim)
    assert bool(jnp.all(jnp.isfinite(y3)))
    assert bool(jnp.all(y3 >= 0.0))  # ReLU output is non-negative
    assert bool(jnp.allclose(y3, reference_forward(x3, params),
                             atol=1e-5, rtol=1e-5))

    x2 = jax.random.normal(kx2, (N * K, input_dim), jnp.float32)
    y2 = jax.block_until_ready(after_pooling_dim_reduce_forward(x2, params))
    assert y2.shape == (N * K, output_dim)
    assert bool(jnp.allclose(y2, reference_forward(x2, params),
                             atol=1e-5, rtol=1e-5))

    # --- exercise the tiled row/column + split-K accumulator path ---
    Din2, Dout2, M2 = 256, 384, 300
    params2 = init_params(kp2, Din2, Dout2)
    kk = jax.random.split(kp2, 4)
    params2["b"] = 0.1 * jax.random.normal(kk[0], (Dout2,), jnp.float32)
    params2["bn_gamma"] = 1.0 + 0.1 * jax.random.normal(kk[1], (Dout2,), jnp.float32)
    params2["bn_beta"] = 0.1 * jax.random.normal(kk[2], (Dout2,), jnp.float32)
    params2["bn_mean"] = 0.1 * jax.random.normal(kk[3], (Dout2,), jnp.float32)
    params2["bn_var"] = jnp.abs(1.0 + 0.1 * jax.random.normal(kk[0], (Dout2,), jnp.float32))

    eps = 1e-5
    s = params2["bn_gamma"] * jax.lax.rsqrt(params2["bn_var"] + eps)
    t = (params2["b"] - params2["bn_mean"]) * s + params2["bn_beta"]
    xb = jax.random.normal(kx3, (M2, Din2), jnp.float32)
    yb = jax.block_until_ready(
        fused_linear_bn_relu(xb, params2["w_t"], s, t, tm=128, tn=128, tk=128))
    assert yb.shape == (M2, Dout2)
    assert bool(jnp.allclose(yb, reference_forward(xb, params2),
                             atol=1e-4, rtol=1e-4))

    print("KERNEL_OK")
</pallas_src>

<mosaic_0001>
module attributes {stable_mosaic.version = 11 : i64} {
  func.func @_fused_kernel_single_k(%arg0: i32, %arg1: i32, %arg2: memref<16x32xf32, #tpu.memory_space<vmem>>, %arg3: memref<32x16xf32, #tpu.memory_space<vmem>>, %arg4: memref<1x16xf32, #tpu.memory_space<vmem>>, %arg5: memref<1x16xf32, #tpu.memory_space<vmem>>, %arg6: memref<16x16xf32, #tpu.memory_space<vmem>>) attributes {dimension_semantics = [#tpu.dimension_semantics<parallel>, #tpu.dimension_semantics<parallel>], iteration_bounds = array<i64: 1, 1>, scalar_prefetch = 0 : i64, scratch_operands = 0 : i64, tpu.core_type = #tpu.core_type<tc>, window_params = [{transform_indices = @transform_0, window_bounds = array<i64: 16, 32>}, {transform_indices = @transform_1, window_bounds = array<i64: 32, 16>}, {transform_indices = @transform_2, window_bounds = array<i64: 1, 16>}, {transform_indices = @transform_3, window_bounds = array<i64: 1, 16>}, {transform_indices = @transform_4, window_bounds = array<i64: 16, 16>}]} {
    %c0 = arith.constant 0 : index
    %c0_0 = arith.constant 0 : index
    %0 = vector.load %arg2[%c0, %c0_0] : memref<16x32xf32, #tpu.memory_space<vmem>>, vector<16x32xf32>
    %c0_1 = arith.constant 0 : index
    %c0_2 = arith.constant 0 : index
    %1 = vector.load %arg3[%c0_1, %c0_2] : memref<32x16xf32, #tpu.memory_space<vmem>>, vector<32x16xf32>
    %cst = arith.constant dense<0.000000e+00> : vector<16x16xf32>
    %2 = tpu.matmul %0, %1, %cst {dimension_numbers = #tpu.dot_dimension_numbers<[1], [0], [0], [1], [0, 0, 1, 1], [], []>} : vector<16x32xf32>, vector<32x16xf32>, vector<16x16xf32> -> vector<16x16xf32>
    %c0_3 = arith.constant 0 : index
    %c0_4 = arith.constant 0 : index
    %3 = vector.load %arg4[%c0_3, %c0_4] : memref<1x16xf32, #tpu.memory_space<vmem>>, vector<1x16xf32>
    %4 = vector.broadcast %3 : vector<1x16xf32> to vector<16x16xf32>
    %5 = arith.mulf %2, %4 : vector<16x16xf32>
    %c0_5 = arith.constant 0 : index
    %c0_6 = arith.constant 0 : index
    %6 = vector.load %arg5[%c0_5, %c0_6] : memref<1x16xf32, #tpu.memory_space<vmem>>, vector<1x16xf32>
    %7 = vector.broadcast %6 : vector<1x16xf32> to vector<16x16xf32>
    %8 = arith.addf %5, %7 : vector<16x16xf32>
    %cst_7 = arith.constant 0.000000e+00 : f32
    %9 = vector.broadcast %cst_7 : f32 to vector<16x16xf32>
    %10 = arith.maximumf %8, %9 : vector<16x16xf32>
    %c0_8 = arith.constant 0 : index
    %c0_9 = arith.constant 0 : index
    %11 = vector.load %arg6[%c0_8, %c0_9] : memref<16x16xf32, #tpu.memory_space<vmem>>, vector<16x16xf32>
    tpu.vector_store %arg6[%c0_8, %c0_9], %10 {strides = array<i32>} : memref<16x16xf32, #tpu.memory_space<vmem>>, vector<16x16xf32>,
    return
  }
  func.func @transform_0(%arg0: i32, %arg1: i32) -> (i32, i32) {
    %c0_i32 = arith.constant 0 : i32
    %c0_i32_0 = arith.constant 0 : i32
    return %arg0, %c0_i32 : i32, i32
  }
  func.func @transform_1(%arg0: i32, %arg1: i32) -> (i32, i32) {
    %c0_i32 = arith.constant 0 : i32
    %c0_i32_0 = arith.constant 0 : i32
    return %c0_i32, %arg1 : i32, i32
  }
  func.func @transform_2(%arg0: i32, %arg1: i32) -> (i32, i32) {
    %c0_i32 = arith.constant 0 : i32
    %c0_i32_0 = arith.constant 0 : i32
    return %c0_i32, %arg1 : i32, i32
  }
  func.func @transform_3(%arg0: i32, %arg1: i32) -> (i32, i32) {
    %c0_i32 = arith.constant 0 : i32
    %c0_i32_0 = arith.constant 0 : i32
    return %c0_i32, %arg1 : i32, i32
  }
  func.func @transform_4(%arg0: i32, %arg1: i32) -> (i32, i32) {
    %c0_i32 = arith.constant 0 : i32
    return %arg0, %arg1 : i32, i32
  }
}

</mosaic_0001>

<llo_original>
// kernel: tpu_custom_call.1
$region0: #{tpu_custom_call.1}
  #allocation0 [shape = 'u32[]', space=smem, size = 0x4, offset = 0x4, fixed_abs, tag = 'smem constant byte address 0x4 - core index']
  #allocation1 [shape = 'u32[144,128]{1,0:T(1,128)}', space=vmem, size = 0x12000, scoped, tag = 'internal scratch']
  %s0 = inlined_call_operand.hbm [shape: f32[16,32], index: 0, kind: input, shape index: {}]
  %s1 = inlined_call_operand.hbm [shape: f32[32,16], index: 1, kind: input, shape index: {}]
  %s2 = inlined_call_operand.hbm [shape: f32[1,16], index: 2, kind: input, shape index: {}]
  %s3 = inlined_call_operand.hbm [shape: f32[1,16], index: 3, kind: input, shape index: {}]
  %s4 = inlined_call_operand.hbm [shape: f32[16,16], index: 4, kind: output, shape index: {}]
  %s5 = sld [smem:[#allocation0]]
  $region42: #{tpu_custom_call.1} parent=0
    _
  %s7 = ssub.s32 1, %s5
  %s8 = scalar_select 0, %s7, %s5
  $region1: #{tpu_custom_call.1} parent=0
    #allocation2 [shape = 'u8[8192]{0}', space=vmem, size = 0x2000, scoped, tag = 'input window, operand 0, single buffered']
    #allocation3 [shape = 's32[1]{0}', space=sflag, size = 0x4, scoped, tag = 'scoped memory for tpu_custom_call.1']
    #allocation4 [shape = 's32[1]{0}', space=sflag, size = 0x4, scoped, tag = 'scoped memory for tpu_custom_call.1']
    #allocation5 [shape = 'u8[16384]{0}', space=vmem, size = 0x4000, scoped, tag = 'input window, operand 1, single buffered']
    #allocation6 [shape = 's32[1]{0}', space=sflag, size = 0x4, scoped, tag = 'scoped memory for tpu_custom_call.1']
    #allocation7 [shape = 'u8[512]{0}', space=vmem, size = 0x400, scoped, tag = 'input window, operand 2, single buffered']
    #allocation8 [shape = 'u8[512]{0}', space=vmem, size = 0x400, scoped, tag = 'input window, operand 3, single buffered']
    #allocation9 [shape = 's32[1]{0}', space=sflag, size = 0x4, scoped, tag = 'scoped memory for tpu_custom_call.1']
    #allocation10 [shape = 'u8[8192]{0}', space=vmem, size = 0x2000, scoped, tag = 'output window, operand 0, single buffered']
    %9 = vsyncpa [#allocation3], 0
    %10 = vsyncpa [#allocation6], 0
    %11 = vsyncpa [#allocation9], 0
    %12 = vsyncpa [#allocation4], 0
    // Predicated region
    $region2: #{tpu_custom_call.1} parent=1 // pred_check
      _
    $region3: #{tpu_custom_call.1} parent=1 // pred_check_branch
      %14 = sbr.rel (0) target = $region5
    $region4: #{tpu_custom_call.1} parent=1 // pred_region
      %s16 = ssub.s32 256, 256
      %17 = vsyncadd [#allocation3], %s16
      %s18 = sshll.u32 [#allocation2], 4
      %s19 = int_to_ptr.vmem [resolvable:$true] %s18
      %24 = dma.hbm_to_vmem [thread:$0]  %s0, 256, %s19, [#allocation3], 128, 128, 8
    $region5: #{tpu_custom_call.1} parent=1 // pred_fallthru
      _
    // Predicated region
    $region6: #{tpu_custom_call.1} parent=1 // pred_check
      _
    $region7: #{tpu_custom_call.1} parent=1 // pred_check_branch
      %26 = sbr.rel (0) target = $region9
    $region8: #{tpu_custom_call.1} parent=1 // pred_region
      %s28 = ssub.s32 512, 512
      %29 = vsyncadd [#allocation6], %s28
      %s30 = sshll.u32 [#allocation5], 4
      %s31 = int_to_ptr.vmem [resolvable:$true] %s30
      %36 = dma.hbm_to_vmem [thread:$0]  %s1, 512, %s31, [#allocation6], 128, 128, 8
    $region9: #{tpu_custom_call.1} parent=1 // pred_fallthru
      _
    // Predicated region
    $region10: #{tpu_custom_call.1} parent=1 // pred_check
      _
    $region11: #{tpu_custom_call.1} parent=1 // pred_check_branch
      %38 = sbr.rel (0) target = $region13
    $region12: #{tpu_custom_call.1} parent=1 // pred_region
      %s40 = ssub.s32 16, 16
      %41 = vsyncadd [#allocation6], %s40
      %s43 = sshll.u32 [#allocation7], 4
      %s44 = int_to_ptr.vmem [resolvable:$true] %s43
      %46 = dma.hbm_to_vmem [thread:$0]  %s2, 16, %s44, [#allocation6]
    $region13: #{tpu_custom_call.1} parent=1 // pred_fallthru
      _
    // Predicated region
    $region14: #{tpu_custom_call.1} parent=1 // pred_check
      _
    $region15: #{tpu_custom_call.1} parent=1 // pred_check_branch
      %48 = sbr.rel (0) target = $region17
    $region16: #{tpu_custom_call.1} parent=1 // pred_region
      %s50 = ssub.s32 16, 16
      %51 = vsyncadd [#allocation9], %s50
      %s53 = sshll.u32 [#allocation8], 4
      %s54 = int_to_ptr.vmem [resolvable:$true] %s53
      %56 = dma.hbm_to_vmem [thread:$0]  %s3, 16, %s54, [#allocation9]
    $region17: #{tpu_custom_call.1} parent=1 // pred_fallthru
      _
    // Predicated region
    $region18: #{tpu_custom_call.1} parent=1 // pred_check
      _
    $region19: #{tpu_custom_call.1} parent=1 // pred_check_branch
      %58 = sbr.rel (0) target = $region21
    $region20: #{tpu_custom_call.1} parent=1 // pred_region
      %59 = dma.done [#allocation3], 256
    $region21: #{tpu_custom_call.1} parent=1 // pred_fallthru
      _
    // Predicated region
    $region22: #{tpu_custom_call.1} parent=1 // pred_check
      _
    $region23: #{tpu_custom_call.1} parent=1 // pred_check_branch
      %61 = sbr.rel (0) target = $region25
    $region24: #{tpu_custom_call.1} parent=1 // pred_region
      %62 = dma.done [#allocation6], 512
    $region25: #{tpu_custom_call.1} parent=1 // pred_fallthru
      _
    // Predicated region
    $region26: #{tpu_custom_call.1} parent=1 // pred_check
      _
    $region27: #{tpu_custom_call.1} parent=1 // pred_check_branch
      %64 = sbr.rel (0) target = $region29
    $region28: #{tpu_custom_call.1} parent=1 // pred_region
      %65 = dma.done [#allocation6], 16
    $region29: #{tpu_custom_call.1} parent=1 // pred_fallthru
      _
    // Predicated region
    $region30: #{tpu_custom_call.1} parent=1 // pred_check
      _
    $region31: #{tpu_custom_call.1} parent=1 // pred_check_branch
      %67 = sbr.rel (0) target = $region33
    $region32: #{tpu_custom_call.1} parent=1 // pred_region
      %68 = dma.done [#allocation9], 16
    $region33: #{tpu_custom_call.1} parent=1 // pred_fallthru
      _
    %v69 = vld [vmem:[#allocation2] sm:$0xff]
    %v70 = vld [vmem:[#allocation2 + $0x8] sm:$0xff]
    %v71 = vld [vmem:[#allocation5] sm:$0xff]
    %v72 = vld [vmem:[#allocation5 + $0x8] sm:$0xff]
    %v73 = vld [vmem:[#allocation5 + $0x10] sm:$0xff]
    %v74 = vld [vmem:[#allocation5 + $0x18] sm:$0xff]
    %vm75 = vcmask 261120
    %v77 = vsel %vm75, %v69, 0
    %v80 = vsel %vm75, %v70, 0
    %82 = vmatprep.subr.mxu0 0.0
    %83 = vmatpush1.msra.mxu0 %v71
    %84 = vmatprep.subr.mxu0 0.0
    %85 = vmatpush1.msra.mxu0 %v72
    %86 = vmatprep.subr.mxu0 0.0
    %87 = vmatpush1.msra.mxu0 %v73
    %88 = vmatprep.subr.mxu0 0.0
    %89 = vmatpush1.msra.mxu0 %v74
    %90 = vmatprep.subr.mxu0 0.0
    %91 = vmatpush1.msra.mxu0 0.0
    %92 = vmatprep.subr.mxu0 0.0
    %93 = vmatpush1.msra.mxu0 0.0
    %94 = vmatprep.subr.mxu0 0.0
    %95 = vmatpush1.msra.mxu0 0.0
    %96 = vmatprep.subr.mxu0 0.0
    %97 = vmatpush1.msra.mxu0 0.0
    %98 = vmatprep.subr.mxu0 0.0
    %99 = vmatpush1.msra.mxu0 0.0
    %100 = vmatprep.subr.mxu0 0.0
    %101 = vmatpush1.msra.mxu0 0.0
    %102 = vmatprep.subr.mxu0 0.0
    %103 = vmatpush1.msra.mxu0 0.0
    %104 = vmatprep.subr.mxu0 0.0
    %105 = vmatpush1.msra.mxu0 0.0
    %106 = vmatprep.subr.mxu0 0.0
    %107 = vmatpush1.msra.mxu0 0.0
    %108 = vmatprep.subr.mxu0 0.0
    %109 = vmatpush1.msra.mxu0 0.0
    %110 = vmatprep.subr.mxu0 0.0
    %111 = vmatpush1.msra.mxu0 0.0
    %112 = vmatprep.subr.mxu0 0.0
    %113 = vmatpush1.msra.mxu0 0.0
    %114 = vmatprep.subr.mxu0 0.0
    %115 = vmatpush1.msra.mxu0 0.0
    %116 = vmatprep.subr.mxu0 0.0
    %117 = vmatpush1.msra.mxu0 0.0
    %118 = vmatprep.subr.mxu0 0.0
    %119 = vmatpush1.msra.mxu0 0.0
    %120 = vmatprep.subr.mxu0 0.0
    %121 = vmatpush1.msra.mxu0 0.0
    %122 = vmatprep.subr.mxu0 0.0
    %123 = vmatpush1.msra.mxu0 0.0
    %124 = vmatprep.subr.mxu0 0.0
    %125 = vmatpush1.msra.mxu0 0.0
    %126 = vmatprep.subr.mxu0 0.0
    %127 = vmatpush1.msra.mxu0 0.0
    %128 = vmatprep.subr.mxu0 0.0
    %129 = vmatpush1.msra.mxu0 0.0
    %130 = vmatprep.subr.mxu0 0.0
    %131 = vmatpush1.msra.mxu0 0.0
    %132 = vmatprep.subr.mxu0 0.0
    %133 = vmatpush1.msra.mxu0 0.0
    %134 = vmatprep.subr.mxu0 0.0
    %135 = vmatpush1.msra.mxu0 0.0
    %136 = vmatprep.subr.mxu0 0.0
    %137 = vmatpush1.msra.mxu0 0.0
    %138 = vmatprep.subr.mxu0 0.0
    %139 = vmatpush1.msra.mxu0 0.0
    %140 = vmatprep.subr.mxu0 0.0
    %141 = vmatpush1.msra.mxu0 0.0
    %142 = vmatprep.subr.mxu0 0.0
    %143 = vmatpush1.msra.mxu0 0.0
    %144 = vmatprep.subr.mxu0 0.0
    %145 = vmatpush1.msra.mxu0 0.0
    %146 = vmatprep.mubr.f32.mxu0 0.0
    %147 = vmatmul.mubr.f32.gmra.mrb[0].mxu0 %v77
    %v148 = vpop.f32.mrb[0].mxu0
    %v149 = vadd.f32 0.0, %v148
    %v150 = vpop.f32.mrb[0].mxu0
    %151 = vmatprep.mubr.f32.mxu0 0.0
    %152 = vmatmul.mubr.f32.gmra.mrb[0].mxu0 %v80
    %v153 = vpop.f32.mrb[0].mxu0
    %v154 = vadd.f32 0.0, %v153
    %v155 = vpop.f32.mrb[0].mxu0
    %156 = vdwg.mxu0
    %v157 = vld [vmem:[#allocation7] sm:$0x1]
    %v159 = vlaneseq
    %v160 = vshrl.u32 %v159, 7
    %v161 = vsub.s32 0, %v160
    %v162 = vrot.slane %v157, %v161
    %v164 = vmul.f32 %v149, %v162
    %v165 = vmul.f32 %v154, %v162
    %v166 = vld [vmem:[#allocation8] sm:$0x1]
    %v168 = vlaneseq
    %v169 = vshrl.u32 %v168, 7
    %v170 = vsub.s32 0, %v169
    %v171 = vrot.slane %v166, %v170
    %v173 = vadd.f32 %v164, %v171
    %v174 = vadd.f32 %v165, %v171
    %v175 = vmax.f32 %v173, 0.0
    %v176 = vmax.f32 %v174, 0.0
    %vm177 = vcmask 130048
    %178 = vst.msk [vmem:[#allocation10] sm:$0xff] %vm177, %v175
    %179 = vst.msk [vmem:[#allocation10 + $0x8] sm:$0xff] %vm177, %v176
    // Predicated region
    $region34: #{tpu_custom_call.1} parent=1 // pred_check
      _
    $region35: #{tpu_custom_call.1} parent=1 // pred_check_branch
      %181 = sbr.rel (0) target = $region37
    $region36: #{tpu_custom_call.1} parent=1 // pred_region
      %s183 = ssub.s32 256, 256
      %184 = vsyncadd [#allocation4], %s183
      %s185 = sshll.u32 [#allocation10], 4
      %s186 = int_to_ptr.vmem [resolvable:$true] %s185
      %191 = dma.vmem_to_hbm [thread:$0]  %s186, 256, %s4, [#allocation4], 128, 128, 8
    $region37: #{tpu_custom_call.1} parent=1 // pred_fallthru
      _
    // Predicated region
    $region38: #{tpu_custom_call.1} parent=1 // pred_check
      _
    $region39: #{tpu_custom_call.1} parent=1 // pred_check_branch
      %193 = sbr.rel (0) target = $region41
    $region40: #{tpu_custom_call.1} parent=1 // pred_region
      %194 = dma.done [#allocation4], 256
    $region41: #{tpu_custom_call.1} parent=1 // pred_fallthru
      _
    %195 = vsyncpa [#allocation3], 1
    %196 = vsyncpa [#allocation6], 1
    %197 = vsyncpa [#allocation9], 1
    %198 = vsyncpa [#allocation4], 1

</llo_original>
